<compile_context>
chip_gen: v6e
topology: v6e:2x2x1
jax: 0.10.0
libtpu: 0.0.40
codegen_flags: <defaults>
</compile_context>

<pallas_src>
import functools
import math

import jax
import jax.numpy as jnp
from jax.experimental import pallas as pl
from jax.experimental.pallas import tpu as pltpu


def _xent_kernel(logits_ref, tgt_ref, acc_ref, *, num_classes, total_s,
                 k_per_split, needs_mask):
    """One grid step: one (spatial-split, batch) pair, one spatial tile.

    logits_ref : (1, C, TR, 128) logits tile (native dtype)
    tgt_ref    : (1, 1, TR, 128) int32 class indices
    acc_ref    : (1, 1, 8, 128)  f32 partial-sum slab, resident across the
                 k (reduction) grid axis.
    """
    k = pl.program_id(2)

    @pl.when(k == 0)
    def _init():
        acc_ref[...] = jnp.zeros_like(acc_ref)

    tgt = tgt_ref[0, 0]                               # (TR, 128) int32

    # Class-axis max over full-density (TR, 128) planes: elementwise VPU work
    # in the native dtype (bf16 stays packed on v6e/v7x), no XLU reduce.
    m = logits_ref[0, 0]
    for c in range(1, num_classes):
        m = jnp.maximum(m, logits_ref[0, c])
    m = m.astype(jnp.float32)

    # exp-sum and target-logit pick, one plane at a time.  Planes are re-read
    # from VMEM per loop so only ~one plane is live at once (no spills).
    # TODO(synk): for very large C (e.g. 1000-class logits) a fori_loop over
    # the class axis would keep code size bounded.
    esum = jnp.zeros(m.shape, jnp.float32)
    picked = jnp.zeros(m.shape, jnp.float32)
    for c in range(num_classes):
        xc = logits_ref[0, c].astype(jnp.float32)
        esum = esum + jnp.exp(xc - m)
        picked = picked + jnp.where(tgt == c, xc, 0.0)

    per_voxel = (m + jnp.log(esum)) - picked          # (TR, 128) f32
    tr = per_voxel.shape[0]

    if needs_mask:
        p = pl.program_id(0)
        row0 = (p * k_per_split + k) * tr
        row = jax.lax.broadcasted_iota(jnp.int32, per_voxel.shape, 0) + row0
        lane = jax.lax.broadcasted_iota(jnp.int32, per_voxel.shape, 1)
        per_voxel = jnp.where(row * 128 + lane < total_s, per_voxel, 0.0)

    if tr % 8 == 0:
        # vreg-aligned (8,128) slabs -> elementwise VPU adds into the resident
        # accumulator; no per-step cross-lane reduce or masked scalar store,
        # and the wide f32 accumulator keeps summation accurate for large S.
        acc_ref[0, 0, :, :] += per_voxel.reshape(tr // 8, 8, 128).sum(axis=0)
    else:
        # Tiny-input fallback (single tile with TR == R < 8 rows).
        acc_ref[0, 0, 0:1, :] += jnp.sum(per_voxel, axis=0, keepdims=True)


def _pick_tile_rows(R, cap_rows=32):
    """Rows of 128 lanes per spatial tile (second-to-last block dim).

    Must be a multiple of 8 or equal to the full extent R.  Capped at 32 rows
    (4096 lanes) so the ~5 (TR,128) f32 temporaries stay well inside the
    64-vreg file; a 4096-lane tile is already >85% of HBM DMA efficiency.
    Divisor tiles are preferred so the in-kernel mask path disappears.
    """
    if R <= cap_rows:
        return R
    best = 8
    tr = 8
    while tr <= cap_rows:
        if R % tr == 0:
            best = tr
        tr += 8
    if R % 8 != 0:
        best = cap_rows          # ragged tail handled by the in-kernel mask
    return best


@jax.jit
def cross_entropy_loss(outputs, targets):
    """Pallas TPU nn.CrossEntropyLoss forward (mean reduction, no weights).

    outputs: (B, C, *spatial) float logits (f32 or bf16)
    targets: (B, *spatial)    integer class indices
    returns: scalar float32 loss
    """
    B, C = outputs.shape[0], outputs.shape[1]
    spatial = outputs.shape[2:]
    assert targets.shape == (B,) + spatial, (targets.shape, outputs.shape)
    S = math.prod(spatial) if spatial else 1
    assert S <= 2**31 - 256, "in-kernel int32 position index would overflow"
    # TODO(synk): PyTorch's default ignore_index=-100 sentinel is not handled;
    # targets must be valid class indices (true for this module's usage).

    logits = outputs.reshape(B, C, S)
    tgt = targets.reshape(B, 1, S)
    if jnp.dtype(tgt.dtype).itemsize != 4:
        tgt = tgt.astype(jnp.int32)     # keep (8,128) block-tiling rules trivial

    R = pl.cdiv(S, 128)
    if R * 128 != S:
        # TODO(synk): ragged S costs one wrapper-side pad copy; a flat-layout
        # masked-tail kernel could avoid it.
        pad = R * 128 - S
        logits = jnp.pad(logits, ((0, 0), (0, 0), (0, pad)))
        tgt = jnp.pad(tgt, ((0, 0), (0, 0), (0, pad)))
    # Lane/sublane-dense layout: each class is a full-density (R, 128) plane.
    logits = logits.reshape(B, C, R, 128)
    tgt = tgt.reshape(B, 1, R, 128)

    TR = _pick_tile_rows(R)
    num_tiles = pl.cdiv(R, TR)
    # v7x megacore coverage when B == 1: split the spatial tile range over a
    # leading "parallel" axis (only when it splits evenly -> no OOB blocks).
    n_split = 2 if (B == 1 and num_tiles >= 2 and num_tiles % 2 == 0) else 1
    k_per_split = num_tiles // n_split
    needs_mask = (num_tiles * TR * 128) != S

    def in_map(p, b, k):
        return (b, 0, p * k_per_split + k, 0)

    kernel = functools.partial(
        _xent_kernel, num_classes=C, total_s=S,
        k_per_split=k_per_split, needs_mask=needs_mask)

    log_isz = jnp.dtype(outputs.dtype).itemsize
    cost = pl.CostEstimate(
        flops=int(6 * B * S * C),
        transcendentals=int(B * S * (C + 1)),          # exp per class + log
        bytes_accessed=int(B * R * 128 * (C * log_isz + 4)
                           + n_split * B * 8 * 128 * 4),
    )

    partial_sums = pl.pallas_call(
        kernel,
        out_shape=jax.ShapeDtypeStruct((n_split, B, 8, 128), jnp.float32),
        grid_spec=pltpu.PrefetchScalarGridSpec(
            num_scalar_prefetch=0,
            grid=(n_split, B, k_per_split),
            in_specs=[
                pl.BlockSpec((1, C, TR, 128), in_map),
                pl.BlockSpec((1, 1, TR, 128), in_map),
            ],
            out_specs=pl.BlockSpec((1, 1, 8, 128), lambda p, b, k: (p, b, 0, 0)),
        ),
        compiler_params=pltpu.CompilerParams(
            dimension_semantics=("parallel", "parallel", "arbitrary"),
            # Explicit limit, well above the small double-buffered working set
            # and inside every generation's scoped VMEM (v5e default is only
            # 16 MiB, so do not rely on "128 MiB physical").
            vmem_limit_bytes=32 * 1024 * 1024,
        ),
        cost_estimate=cost,
    )(logits, tgt)

    # Tiny (n_split, B, 8, 128) -> scalar combine in plain JAX.
    return jnp.sum(partial_sums) / (B * S)


def cross_entropy_loss_ref(outputs, targets):
    """Pure-JAX reference mirroring nn.CrossEntropyLoss (mean reduction)."""
    x = outputs.astype(jnp.float32)
    lse = jax.scipy.special.logsumexp(x, axis=1)                     # (B, *sp)
    picked = jnp.take_along_axis(
        x, targets[:, None].astype(jnp.int32), axis=1)[:, 0]         # (B, *sp)
    return jnp.mean(lse - picked)


if __name__ == "__main__":
    key = jax.random.PRNGKey(0)
    k1, k2, k3, k4 = jax.random.split(key, 4)

    # Case 1: the module's nominal small shape (single tile, TR == R path).
    B, C, H, W = 2, 4, 16, 16
    outputs = jax.random.normal(k1, (B, C, H, W), dtype=jnp.float32)
    targets = jax.random.randint(k2, (B, H, W), 0, C, dtype=jnp.int32)
    loss = jax.block_until_ready(cross_entropy_loss(outputs, targets))
    ref = jax.block_until_ready(cross_entropy_loss_ref(outputs, targets))
    assert jnp.allclose(loss, ref, rtol=1e-5, atol=1e-6), (loss, ref)

    # Case 2: multi-tile spatial reduction path (B=1, several 8x128 tiles).
    B2, C2 = 1, 3
    outputs2 = jax.random.normal(k3, (B2, C2, 40, 128), dtype=jnp.float32)
    targets2 = jax.random.randint(k4, (B2, 40, 128), 0, C2, dtype=jnp.int32)
    loss2 = jax.block_until_ready(cross_entropy_loss(outputs2, targets2))
    ref2 = jax.block_until_ready(cross_entropy_loss_ref(outputs2, targets2))
    assert jnp.allclose(loss2, ref2, rtol=1e-5, atol=1e-6), (loss2, ref2)

    print("KERNEL_OK")
</pallas_src>

<mosaic_0001>
module attributes {stable_mosaic.version = 11 : i64} {
  func.func @_xent_kernel(%arg0: i32, %arg1: i32, %arg2: i32, %arg3: memref<1x4x2x128xf32, #tpu.memory_space<vmem>>, %arg4: memref<1x1x2x128xi32, #tpu.memory_space<vmem>>, %arg5: memref<1x1x8x128xf32, #tpu.memory_space<vmem>>) attributes {dimension_semantics = [#tpu.dimension_semantics<parallel>, #tpu.dimension_semantics<parallel>, #tpu.dimension_semantics<arbitrary>], iteration_bounds = array<i64: 1, 2, 1>, scalar_prefetch = 0 : i64, scratch_operands = 0 : i64, tpu.core_type = #tpu.core_type<tc>, window_params = [{transform_indices = @transform_0, window_bounds = array<i64: 1, 4, 2, 128>}, {transform_indices = @transform_1, window_bounds = array<i64: 1, 1, 2, 128>}, {transform_indices = @transform_2, window_bounds = array<i64: 1, 1, 8, 128>}]} {
    %c0_i32 = arith.constant 0 : i32
    %0 = arith.cmpi eq, %arg2, %c0_i32 : i32
    %1 = arith.extui %0 : i1 to i32
    %c0_i32_0 = arith.constant 0 : i32
    %2 = arith.cmpi ne, %1, %c0_i32_0 : i32
    scf.if %2 {
      %cst_48 = arith.constant 0.000000e+00 : f32
      %69 = vector.broadcast %cst_48 : f32 to vector<1x1x8x128xf32>
      %c0_49 = arith.constant 0 : index
      %c0_50 = arith.constant 0 : index
      %c0_51 = arith.constant 0 : index
      %c0_52 = arith.constant 0 : index
      %70 = vector.load %arg5[%c0_49, %c0_50, %c0_51, %c0_52] : memref<1x1x8x128xf32, #tpu.memory_space<vmem>>, vector<1x1x8x128xf32>
      tpu.vector_store %arg5[%c0_49, %c0_50, %c0_51, %c0_52], %69 {strides = array<i32>} : memref<1x1x8x128xf32, #tpu.memory_space<vmem>>, vector<1x1x8x128xf32>,
    } else {
    }
    %c0 = arith.constant 0 : index
    %c0_1 = arith.constant 0 : index
    %c0_2 = arith.constant 0 : index
    %c0_3 = arith.constant 0 : index
    %3 = vector.load %arg4[%c0, %c0_1, %c0_2, %c0_3] : memref<1x1x2x128xi32, #tpu.memory_space<vmem>>, vector<1x1x2x128xi32>
    %4 = vector.shape_cast %3 : vector<1x1x2x128xi32> to vector<2x128xi32>
    %c0_4 = arith.constant 0 : index
    %c0_5 = arith.constant 0 : index
    %c0_6 = arith.constant 0 : index
    %c0_7 = arith.constant 0 : index
    %5 = vector.load %arg3[%c0_4, %c0_5, %c0_6, %c0_7] : memref<1x4x2x128xf32, #tpu.memory_space<vmem>>, vector<1x1x2x128xf32>
    %6 = vector.shape_cast %5 : vector<1x1x2x128xf32> to vector<2x128xf32>
    %c0_8 = arith.constant 0 : index
    %c1 = arith.constant 1 : index
    %c0_9 = arith.constant 0 : index
    %c0_10 = arith.constant 0 : index
    %7 = vector.load %arg3[%c0_8, %c1, %c0_9, %c0_10] : memref<1x4x2x128xf32, #tpu.memory_space<vmem>>, vector<1x1x2x128xf32>
    %8 = vector.shape_cast %7 : vector<1x1x2x128xf32> to vector<2x128xf32>
    %9 = arith.maximumf %6, %8 : vector<2x128xf32>
    %c0_11 = arith.constant 0 : index
    %c2 = arith.constant 2 : index
    %c0_12 = arith.constant 0 : index
    %c0_13 = arith.constant 0 : index
    %10 = vector.load %arg3[%c0_11, %c2, %c0_12, %c0_13] : memref<1x4x2x128xf32, #tpu.memory_space<vmem>>, vector<1x1x2x128xf32>
    %11 = vector.shape_cast %10 : vector<1x1x2x128xf32> to vector<2x128xf32>
    %12 = arith.maximumf %9, %11 : vector<2x128xf32>
    %c0_14 = arith.constant 0 : index
    %c3 = arith.constant 3 : index
    %c0_15 = arith.constant 0 : index
    %c0_16 = arith.constant 0 : index
    %13 = vector.load %arg3[%c0_14, %c3, %c0_15, %c0_16] : memref<1x4x2x128xf32, #tpu.memory_space<vmem>>, vector<1x1x2x128xf32>
    %14 = vector.shape_cast %13 : vector<1x1x2x128xf32> to vector<2x128xf32>
    %15 = arith.maximumf %12, %14 : vector<2x128xf32>
    %cst = arith.constant 0.000000e+00 : f32
    %16 = vector.broadcast %cst : f32 to vector<2x128xf32>
    %cst_17 = arith.constant 0.000000e+00 : f32
    %17 = vector.broadcast %cst_17 : f32 to vector<2x128xf32>
    %c0_18 = arith.constant 0 : index
    %c0_19 = arith.constant 0 : index
    %c0_20 = arith.constant 0 : index
    %c0_21 = arith.constant 0 : index
    %18 = vector.load %arg3[%c0_18, %c0_19, %c0_20, %c0_21] : memref<1x4x2x128xf32, #tpu.memory_space<vmem>>, vector<1x1x2x128xf32>
    %19 = vector.shape_cast %18 : vector<1x1x2x128xf32> to vector<2x128xf32>
    %20 = arith.subf %19, %15 : vector<2x128xf32>
    %21 = math.exp %20 : vector<2x128xf32>
    %22 = arith.addf %16, %21 : vector<2x128xf32>
    %c0_i32_22 = arith.constant 0 : i32
    %23 = vector.broadcast %c0_i32_22 : i32 to vector<2x128xi32>
    %24 = arith.cmpi eq, %4, %23 : vector<2x128xi32>
    %cst_23 = arith.constant 0.000000e+00 : f32
    %25 = vector.broadcast %cst_23 : f32 to vector<2x128xf32>
    %26 = arith.select %24, %19, %25 : vector<2x128xi1>, vector<2x128xf32>
    %27 = arith.addf %17, %26 : vector<2x128xf32>
    %c0_24 = arith.constant 0 : index
    %c1_25 = arith.constant 1 : index
    %c0_26 = arith.constant 0 : index
    %c0_27 = arith.constant 0 : index
    %28 = vector.load %arg3[%c0_24, %c1_25, %c0_26, %c0_27] : memref<1x4x2x128xf32, #tpu.memory_space<vmem>>, vector<1x1x2x128xf32>
    %29 = vector.shape_cast %28 : vector<1x1x2x128xf32> to vector<2x128xf32>
    %30 = arith.subf %29, %15 : vector<2x128xf32>
    %31 = math.exp %30 : vector<2x128xf32>
    %32 = arith.addf %22, %31 : vector<2x128xf32>
    %c1_i32 = arith.constant 1 : i32
    %33 = vector.broadcast %c1_i32 : i32 to vector<2x128xi32>
    %34 = arith.cmpi eq, %4, %33 : vector<2x128xi32>
    %cst_28 = arith.constant 0.000000e+00 : f32
    %35 = vector.broadcast %cst_28 : f32 to vector<2x128xf32>
    %36 = arith.select %34, %29, %35 : vector<2x128xi1>, vector<2x128xf32>
    %37 = arith.addf %27, %36 : vector<2x128xf32>
    %c0_29 = arith.constant 0 : index
    %c2_30 = arith.constant 2 : index
    %c0_31 = arith.constant 0 : index
    %c0_32 = arith.constant 0 : index
    %38 = vector.load %arg3[%c0_29, %c2_30, %c0_31, %c0_32] : memref<1x4x2x128xf32, #tpu.memory_space<vmem>>, vector<1x1x2x128xf32>
    %39 = vector.shape_cast %38 : vector<1x1x2x128xf32> to vector<2x128xf32>
    %40 = arith.subf %39, %15 : vector<2x128xf32>
    %41 = math.exp %40 : vector<2x128xf32>
    %42 = arith.addf %32, %41 : vector<2x128xf32>
    %c2_i32 = arith.constant 2 : i32
    %43 = vector.broadcast %c2_i32 : i32 to vector<2x128xi32>
    %44 = arith.cmpi eq, %4, %43 : vector<2x128xi32>
    %cst_33 = arith.constant 0.000000e+00 : f32
    %45 = vector.broadcast %cst_33 : f32 to vector<2x128xf32>
    %46 = arith.select %44, %39, %45 : vector<2x128xi1>, vector<2x128xf32>
    %47 = arith.addf %37, %46 : vector<2x128xf32>
    %c0_34 = arith.constant 0 : index
    %c3_35 = arith.constant 3 : index
    %c0_36 = arith.constant 0 : index
    %c0_37 = arith.constant 0 : index
    %48 = vector.load %arg3[%c0_34, %c3_35, %c0_36, %c0_37] : memref<1x4x2x128xf32, #tpu.memory_space<vmem>>, vector<1x1x2x128xf32>
    %49 = vector.shape_cast %48 : vector<1x1x2x128xf32> to vector<2x128xf32>
    %50 = arith.subf %49, %15 : vector<2x128xf32>
    %51 = math.exp %50 : vector<2x128xf32>
    %52 = arith.addf %42, %51 : vector<2x128xf32>
    %c3_i32 = arith.constant 3 : i32
    %53 = vector.broadcast %c3_i32 : i32 to vector<2x128xi32>
    %54 = arith.cmpi eq, %4, %53 : vector<2x128xi32>
    %cst_38 = arith.constant 0.000000e+00 : f32
    %55 = vector.broadcast %cst_38 : f32 to vector<2x128xf32>
    %56 = arith.select %54, %49, %55 : vector<2x128xi1>, vector<2x128xf32>
    %57 = arith.addf %47, %56 : vector<2x128xf32>
    %58 = math.log %52 : vector<2x128xf32>
    %59 = arith.addf %15, %58 : vector<2x128xf32>
    %60 = arith.subf %59, %57 : vector<2x128xf32>
    %c0_39 = arith.constant 0 : index
    %c0_40 = arith.constant 0 : index
    %c0_41 = arith.constant 0 : index
    %c0_42 = arith.constant 0 : index
    %61 = vector.load %arg5[%c0_39, %c0_40, %c0_41, %c0_42] : memref<1x1x8x128xf32, #tpu.memory_space<vmem>>, vector<1x1x1x128xf32>
    %62 = vector.shape_cast %61 : vector<1x1x1x128xf32> to vector<1x128xf32>
    %cst_43 = arith.constant dense<0.000000e+00> : vector<128xf32>
    %63 = vector.multi_reduction <add>, %60, %cst_43 [0] : vector<2x128xf32> to vector<128xf32>
    %64 = vector.shape_cast %63 : vector<128xf32> to vector<1x128xf32>
    %65 = arith.addf %62, %64 : vector<1x128xf32>
    %c0_44 = arith.constant 0 : index
    %c0_45 = arith.constant 0 : index
    %c0_46 = arith.constant 0 : index
    %c0_47 = arith.constant 0 : index
    %66 = vector.load %arg5[%c0_44, %c0_45, %c0_46, %c0_47] : memref<1x1x8x128xf32, #tpu.memory_space<vmem>>, vector<1x1x1x128xf32>
    %67 = vector.shape_cast %66 : vector<1x1x1x128xf32> to vector<1x128xf32>
    %68 = vector.shape_cast %65 : vector<1x128xf32> to vector<1x1x1x128xf32>
    tpu.vector_store %arg5[%c0_44, %c0_45, %c0_46, %c0_47], %68 {strides = array<i32>} : memref<1x1x8x128xf32, #tpu.memory_space<vmem>>, vector<1x1x1x128xf32>,
    return
  }
  func.func @transform_0(%arg0: i32, %arg1: i32, %arg2: i32) -> (i32, i32, i32, i32) {
    %c1_i32 = arith.constant 1 : i32
    %0 = arith.muli %arg0, %c1_i32 : i32
    %1 = arith.addi %0, %arg2 : i32
    %c0_i32 = arith.constant 0 : i32
    %c0_i32_0 = arith.constant 0 : i32
    %c0_i32_1 = arith.constant 0 : i32
    return %arg1, %c0_i32, %1, %c0_i32_0 : i32, i32, i32, i32
  }
  func.func @transform_1(%arg0: i32, %arg1: i32, %arg2: i32) -> (i32, i32, i32, i32) {
    %c1_i32 = arith.constant 1 : i32
    %0 = arith.muli %arg0, %c1_i32 : i32
    %1 = arith.addi %0, %arg2 : i32
    %c0_i32 = arith.constant 0 : i32
    %c0_i32_0 = arith.constant 0 : i32
    %c0_i32_1 = arith.constant 0 : i32
    return %arg1, %c0_i32, %1, %c0_i32_0 : i32, i32, i32, i32
  }
  func.func @transform_2(%arg0: i32, %arg1: i32, %arg2: i32) -> (i32, i32, i32, i32) {
    %c0_i32 = arith.constant 0 : i32
    %c0_i32_0 = arith.constant 0 : i32
    %c0_i32_1 = arith.constant 0 : i32
    return %arg0, %arg1, %c0_i32, %c0_i32_0 : i32, i32, i32, i32
  }
}

</mosaic_0001>

<llo_original>
// kernel: cross_entropy_loss.1
$region0: #{cross_entropy_loss.1}
  #allocation0 [shape = 'u32[]', space=smem, size = 0x4, offset = 0x4, fixed_abs, tag = 'smem constant byte address 0x4 - core index']
  #allocation1 [shape = 'u32[144,128]{1,0:T(1,128)}', space=vmem, size = 0x12000, scoped, tag = 'internal scratch']
  %s0 = inlined_call_operand.vmem [shape: f32[2,4,2,128], index: 0, kind: input, shape index: {}]
  %s1 = inlined_call_operand.vmem [shape: s32[2,1,2,128], index: 1, kind: input, shape index: {}]
  %s2 = inlined_call_operand.vmem [shape: f32[1,2,8,128], index: 2, kind: output, shape index: {}]
  %s3 = sld [smem:[#allocation0]]
  $region45: #{cross_entropy_loss.1} parent=0
    _
  %s5 = ssub.s32 1, %s3
  %s6 = scalar_select 0, %s5, %s3
  loop: start=0, step=1, limit=4
  $region2: #{cross_entropy_loss.1} parent=0 // loop_pre_header
    _
  $region3: #{cross_entropy_loss.1} parent=0 // loop_header
    %s8 = sphi 0, %s12
    %p9 = scmp.ge.s32.totalorder %s8, 4
    %s15 = sphi 0, %s34
    %s16 = sphi 0, %s30
    %s17 = sphi 0, %s26
    %s18 = sphi 0, %s15
    %s19 = sphi 0, %s16
    %s20 = sphi 0, %s17
    %s21 = sphi 0, %s18
    %s22 = sphi 0, %s19
    %s23 = sphi 0, %s20
    %s41 = sphi 0, %s43
    %s44 = sphi 0, %s41
    %s45 = sphi 0, %s44
    %s61 = sphi 0, %s45
    %s71 = sphi 0, %s73
    %s74 = sphi 0, %s71
    %s75 = sphi 0, %s74
    %s91 = sphi 0, %s75
    %s99 = sphi 0, %s101
    %s102 = sphi 0, %s99
    %s103 = sphi 0, %s102
    %s119 = sphi 0, %s103
  $region4: #{cross_entropy_loss.1} parent=0 // loop_header_branch
    %11 = sbr.rel (%p9) target = $region8
  $region5: #{cross_entropy_loss.1} parent=0 // loop_body
    %s13 = ssub.s32 %s8, 1
    %s14 = ssub.s32 %s8, 2
    %s24 = sadd.s32 1, %s17
    %p25 = scmp.ge.s32.totalorder %s24, 1
    %s26 = scalar_select %p25, 0, %s24
    %s27 = sadd.s32 1, %s16
    %s28 = scalar_select %p25, %s27, %s16
    %p29 = scmp.ge.s32.totalorder %s28, 2
    %s30 = scalar_select %p29, 0, %s28
    %s31 = sadd.s32 1, %s15
    %s32 = scalar_select %p29, %s31, %s15
    %p33 = scmp.ge.s32.totalorder %s32, 1
    %s34 = scalar_select %p33, 0, %s32
    %s35 = sadd.s32 %s15, %s17
    %s36 = sadd.s32 %s34, %s26
    %s37 = ssub.s32 %s16, %s30
    %s38 = ssub.s32 %s35, %s36
    %s39 = sor.u32 %s37, %s38
    %p40 = scmp.eq.s32.totalorder %s39, 0
    %s42 = sadd.s32 %s41, 1
    %s43 = scalar_select %p40, %s41, %s42
    %p46 = pneg %p40
    %p47 = scmp.eq.s32.totalorder %s8, 1
    %p48 = por %p46, %p47
    %p49 = scmp.ne.s32.totalorder %s41, %s44
    %p50 = scmp.eq.s32.totalorder %s8, 0
    %p51 = por %p49, %p50
    %p52 = scmp.ne.s32.totalorder %s41, %s44
    %p53 = scmp.eq.s32.totalorder %s13, 1
    %p54 = por %p52, %p53
    %p55 = scmp.ne.s32.totalorder %s44, %s45
    %p56 = scmp.eq.s32.totalorder %s13, 0
    %p57 = por %p55, %p56
    %p58 = scmp.ne.s32.totalorder %s44, %s45
    %p59 = scmp.eq.s32.totalorder %s14, 1
    %p60 = por %p58, %p59
    %p62 = scmp.ne.s32.totalorder %s45, %s61
    %p63 = scmp.eq.s32.totalorder %s14, 0
    %p64 = por %p62, %p63
    %s65 = sadd.s32 %s15, %s17
    %s66 = sadd.s32 %s34, %s26
    %s67 = ssub.s32 %s16, %s30
    %s68 = ssub.s32 %s65, %s66
    %s69 = sor.u32 %s67, %s68
    %p70 = scmp.eq.s32.totalorder %s69, 0
    %s72 = sadd.s32 %s71, 1
    %s73 = scalar_select %p70, %s71, %s72
    %p76 = pneg %p70
    %p77 = scmp.eq.s32.totalorder %s8, 1
    %p78 = por %p76, %p77
    %p79 = scmp.ne.s32.totalorder %s71, %s74
    %p80 = scmp.eq.s32.totalorder %s8, 0
    %p81 = por %p79, %p80
    %p82 = scmp.ne.s32.totalorder %s71, %s74
    %p83 = scmp.eq.s32.totalorder %s13, 1
    %p84 = por %p82, %p83
    %p85 = scmp.ne.s32.totalorder %s74, %s75
    %p86 = scmp.eq.s32.totalorder %s13, 0
    %p87 = por %p85, %p86
    %p88 = scmp.ne.s32.totalorder %s74, %s75
    %p89 = scmp.eq.s32.totalorder %s14, 1
    %p90 = por %p88, %p89
    %p92 = scmp.ne.s32.totalorder %s75, %s91
    %p93 = scmp.eq.s32.totalorder %s14, 0
    %p94 = por %p92, %p93
    %s95 = ssub.s32 %s15, %s34
    %s96 = ssub.s32 %s16, %s30
    %s97 = sor.u32 %s95, %s96
    %p98 = scmp.eq.s32.totalorder %s97, 0
    %s100 = sadd.s32 %s99, 1
    %s101 = scalar_select %p98, %s99, %s100
    %p104 = pneg %p98
    %p105 = scmp.eq.s32.totalorder %s8, 1
    %p106 = por %p104, %p105
    %p107 = scmp.ne.s32.totalorder %s99, %s102
    %p108 = scmp.eq.s32.totalorder %s8, 0
    %p109 = por %p107, %p108
    %p110 = scmp.ne.s32.totalorder %s99, %s102
    %p111 = scmp.eq.s32.totalorder %s13, 1
    %p112 = por %p110, %p111
    %p113 = scmp.ne.s32.totalorder %s102, %s103
    %p114 = scmp.eq.s32.totalorder %s13, 0
    %p115 = por %p113, %p114
    %p116 = scmp.ne.s32.totalorder %s102, %s103
    %p117 = scmp.eq.s32.totalorder %s14, 1
    %p118 = por %p116, %p117
    %p120 = scmp.ne.s32.totalorder %s103, %s119
    %p121 = scmp.eq.s32.totalorder %s14, 0
    %p122 = por %p120, %p121
    %p123 = scmp.le.s32.totalorder 1, %s8
    %p124 = scmp.lt.s32.totalorder %s8, 3
    %p125 = pnand %p123, %p124
    %p126 = pneg %p125
    // Predicated region
    $region9: #{cross_entropy_loss.1} parent=5 // pred_check
      _
    $region10: #{cross_entropy_loss.1} parent=5 // pred_check_branch
      %128 = sbr.rel (%p125) target = $region12
    $region11: #{cross_entropy_loss.1} parent=5 // pred_region
      %s129 = ssub.s32 %s8, 1
    $region12: #{cross_entropy_loss.1} parent=5 // pred_fallthru
      _
    %p130 = scmp.lt.s32.totalorder %s8, 2
    // Predicated region
    $region13: #{cross_entropy_loss.1} parent=5 // pred_check
      %p131 = pneg %p130
    $region14: #{cross_entropy_loss.1} parent=5 // pred_check_branch
      %133 = sbr.rel (%p131) target = $region16
    $region15: #{cross_entropy_loss.1} parent=5 // pred_region
      // Predicated region
      $region17: #{cross_entropy_loss.1} parent=15 // pred_check
        %p134 = pneg %p51
      $region18: #{cross_entropy_loss.1} parent=15 // pred_check_branch
        %136 = sbr.rel (%p134) target = $region20
      $region19: #{cross_entropy_loss.1} parent=15 // pred_region
        %s137 = sadd.s32 %s15, %s17
        %p138 = scmp.lt.s32.totalorder %s16, 1
        %s139 = scalar_select %p138, %s16, 1
        %p140 = scmp.lt.s32.totalorder %s137, 0
        %s141 = scalar_select %p140, %s137, 0
        %s142 = smul.addr %s139, 4
        %s143 = sadd.s32 %s141, %s142
        %s144 = smul.addr %s143, 2
        %s145 = scalar_lea.vmem %s0, %s144
        %s146 = sadd.s32 %s15, %s17
      $region20: #{cross_entropy_loss.1} parent=15 // pred_fallthru
        _
      // Predicated region
      $region21: #{cross_entropy_loss.1} parent=15 // pred_check
        %p147 = pneg %p81
      $region22: #{cross_entropy_loss.1} parent=15 // pred_check_branch
        %149 = sbr.rel (%p147) target = $region24
      $region23: #{cross_entropy_loss.1} parent=15 // pred_region
        %s150 = sadd.s32 %s15, %s17
        %p151 = scmp.lt.s32.totalorder %s16, 1
        %s152 = scalar_select %p151, %s16, 1
        %p153 = scmp.lt.s32.totalorder %s150, 0
        %s154 = scalar_select %p153, %s150, 0
        %s155 = sadd.s32 %s154, %s152
        %s156 = smul.addr %s155, 2
        %s157 = scalar_lea.vmem %s1, %s156
        %s158 = sadd.s32 %s15, %s17
      $region24: #{cross_entropy_loss.1} parent=15 // pred_fallthru
        _
    $region16: #{cross_entropy_loss.1} parent=5 // pred_fallthru
      _
    %p159 = scmp.le.s32.totalorder 1, %s8
    %p160 = scmp.lt.s32.totalorder %s8, 3
    %p161 = pnand %p159, %p160
    %p162 = pneg %p161
    // Predicated region
    $region25: #{cross_entropy_loss.1} parent=5 // pred_check
      _
    $region26: #{cross_entropy_loss.1} parent=5 // pred_check_branch
      %164 = sbr.rel (%p161) target = $region28
    $region27: #{cross_entropy_loss.1} parent=5 // pred_region
      %s165 = ssub.s32 %s8, 1
      %s166 = sadd.s32 %s18, %s20
      %p167 = scmp.lt.s32.totalorder %s19, 1
      %s168 = scalar_select %p167, %s19, 1
      %p169 = scmp.lt.s32.totalorder %s166, 0
      %s170 = scalar_select %p169, %s166, 0
      %s171 = smul.addr %s168, 4
      %s172 = sadd.s32 %s170, %s171
      %s173 = smul.addr %s172, 2
      %s174 = scalar_lea.vmem %s0, %s173
      %p175 = pneg %p57
      %p176 = pneg %p54
      %s177 = sadd.s32 %s18, %s20
      %p178 = scmp.lt.s32.totalorder %s19, 1
      %s179 = scalar_select %p178, %s19, 1
      %p180 = scmp.lt.s32.totalorder %s177, 0
      %s181 = scalar_select %p180, %s177, 0
      %s182 = sadd.s32 %s181, %s179
      %s183 = smul.addr %s182, 2
      %s184 = scalar_lea.vmem %s1, %s183
      %p185 = pneg %p87
      %p186 = pneg %p84
      %p187 = pneg %p115
      %p188 = pneg %p112
      %p189 = scmp.lt.s32.totalorder %s18, 0
      %s190 = scalar_select %p189, %s18, 0
      %p191 = scmp.lt.s32.totalorder %s19, 1
      %s192 = scalar_select %p191, %s19, 1
      %s193 = smul.addr %s190, 2
      %s194 = sadd.s32 %s192, %s193
      %s195 = smul.addr %s194, 8
      %s196 = scalar_lea.vmem %s2, %s195
      %s197 = sadd.s32 %s18, %s20
      %p198 = scmp.lt.s32.totalorder %s19, 1
      %s199 = scalar_select %p198, %s19, 1
      %p200 = scmp.lt.s32.totalorder %s197, 0
      %s201 = scalar_select %p200, %s197, 0
      %s202 = smul.addr %s199, 4
      %s203 = sadd.s32 %s201, %s202
      %s204 = smul.addr %s203, 2
      %s205 = scalar_lea.vmem %s0, %s204
      %s206 = sadd.s32 %s18, %s20
      %s207 = sadd.s32 %s18, %s20
      %p208 = scmp.lt.s32.totalorder %s19, 1
      %s209 = scalar_select %p208, %s19, 1
      %p210 = scmp.lt.s32.totalorder %s207, 0
      %s211 = scalar_select %p210, %s207, 0
      %s212 = sadd.s32 %s211, %s209
      %s213 = smul.addr %s212, 2
      %s214 = scalar_lea.vmem %s1, %s213
      %s215 = sadd.s32 %s18, %s20
      %p216 = scmp.lt.s32.totalorder %s18, 0
      %s217 = scalar_select %p216, %s18, 0
      %p218 = scmp.lt.s32.totalorder %s19, 1
      %s219 = scalar_select %p218, %s19, 1
      %s220 = smul.addr %s217, 2
      %s221 = sadd.s32 %s219, %s220
      %s222 = smul.addr %s221, 8
      %s223 = scalar_lea.vmem %s2, %s222
      %p224 = scmp.eq.s32.totalorder %s20, 0
      // Predicated region
      $region29: #{cross_entropy_loss.1} parent=27 // pred_check
        %p225 = pneg %p224
      $region30: #{cross_entropy_loss.1} parent=27 // pred_check_branch
        %227 = sbr.rel (%p225) target = $region32
      $region31: #{cross_entropy_loss.1} parent=27 // pred_region
        %228 = vst [vmem:[%s223] sm:$0xff] 0.0
      $region32: #{cross_entropy_loss.1} parent=27 // pred_fallthru
        _
      %v229 = vld [vmem:[%s214] sm:$0x3]
      %v230 = vld [vmem:[%s205] sm:$0x3]
      %s231 = scalar_lea.vmem %s205, 2
      %v232 = vld [vmem:[%s231] sm:$0x3]
      %v233 = vmax.f32 %v230, %v232
      %s234 = scalar_lea.vmem %s205, 4
      %v235 = vld [vmem:[%s234] sm:$0x3]
      %v236 = vmax.f32 %v233, %v235
      %s237 = scalar_lea.vmem %s205, 6
      %v238 = vld [vmem:[%s237] sm:$0x3]
      %v239 = vmax.f32 %v236, %v238
      %v240 = vsub.f32 %v230, %v239
      %v241 = vmul.f32 %v240, 1.442695
      %v242 = vpow.pop %v241
      %v243 = vadd.f32 %v242, 0.0
      %vm244 = vcmp.eq.s32.totalorder %v229, 0
      %v245 = vsel %vm244, %v230, 0.0
      %v246 = vadd.f32 %v245, 0.0
      %v247 = vsub.f32 %v232, %v239
      %v248 = vmul.f32 %v247, 1.442695
      %v249 = vpow.pop %v248
      %v250 = vadd.f32 %v243, %v249
      %vm251 = vcmp.eq.s32.totalorder %v229, 1
      %v252 = vsel %vm251, %v232, 0.0
      %v253 = vadd.f32 %v246, %v252
      %v254 = vsub.f32 %v235, %v239
      %v255 = vmul.f32 %v254, 1.442695
      %v256 = vpow.pop %v255
      %v257 = vadd.f32 %v250, %v256
      %vm258 = vcmp.eq.s32.totalorder %v229, 2
      %v259 = vsel %vm258, %v235, 0.0
      %v260 = vadd.f32 %v253, %v259
      %v261 = vsub.f32 %v238, %v239
      %v262 = vmul.f32 %v261, 1.442695
      %v263 = vpow.pop %v262
      %v264 = vadd.f32 %v257, %v263
      %vm265 = vcmp.eq.s32.totalorder %v229, 3
      %v266 = vsel %vm265, %v238, 0.0
      %v267 = vadd.f32 %v260, %v266
      %v268 = vlog2.pop %v264
      %v269 = vmul.f32 %v268, 0.6931472
      %v270 = vadd.f32 %v239, %v269
      %v271 = vsub.f32 %v270, %v267
      %v272 = vld [vmem:[%s223] sm:$0x1]
      %vm273 = vcmask 1041408
      %v274 = vsel %vm273, %v271, 0.0
      %v275 = vrot.slane %v274, 4
      %v276 = vadd.f32 %v274, %v275
      %v277 = vrot.slane %v276, 2
      %v278 = vadd.f32 %v276, %v277
      %v279 = vrot.slane %v278, 1
      %v280 = vadd.f32 %v278, %v279
      %v281 = vadd.f32 %v272, %v280
      %282 = vst [vmem:[%s223] sm:$0x1] %v281
      %p283 = scmp.lt.s32.totalorder %s18, 0
      %s284 = scalar_select %p283, %s18, 0
      %p285 = scmp.lt.s32.totalorder %s19, 1
      %s286 = scalar_select %p285, %s19, 1
      %s287 = smul.addr %s284, 2
      %s288 = sadd.s32 %s286, %s287
      %s289 = smul.addr %s288, 8
      %s290 = scalar_lea.vmem %s2, %s289
      // Predicated region
      $region33: #{cross_entropy_loss.1} parent=27 // pred_check
        %p291 = pneg %p112
      $region34: #{cross_entropy_loss.1} parent=27 // pred_check_branch
        %293 = sbr.rel (%p291) target = $region36
      $region35: #{cross_entropy_loss.1} parent=27 // pred_region
        _
      $region36: #{cross_entropy_loss.1} parent=27 // pred_fallthru
        _
    $region28: #{cross_entropy_loss.1} parent=5 // pred_fallthru
      _
    %p294 = scmp.le.s32.totalorder 2, %s8
    // Predicated region
    $region37: #{cross_entropy_loss.1} parent=5 // pred_check
      %p295 = pneg %p294
    $region38: #{cross_entropy_loss.1} parent=5 // pred_check_branch
      %297 = sbr.rel (%p295) target = $region40
    $region39: #{cross_entropy_loss.1} parent=5 // pred_region
      %s298 = ssub.s32 %s8, 2
      // Predicated region
      $region41: #{cross_entropy_loss.1} parent=39 // pred_check
        %p299 = pneg %p118
      $region42: #{cross_entropy_loss.1} parent=39 // pred_check_branch
        %301 = sbr.rel (%p299) target = $region44
      $region43: #{cross_entropy_loss.1} parent=39 // pred_region
        %p302 = scmp.lt.s32.totalorder %s21, 0
        %s303 = scalar_select %p302, %s21, 0
        %p304 = scmp.lt.s32.totalorder %s22, 1
        %s305 = scalar_select %p304, %s22, 1
        %s306 = smul.addr %s303, 2
        %s307 = sadd.s32 %s305, %s306
        %s308 = smul.addr %s307, 8
        %s309 = scalar_lea.vmem %s2, %s308
      $region44: #{cross_entropy_loss.1} parent=39 // pred_fallthru
        _
    $region40: #{cross_entropy_loss.1} parent=5 // pred_fallthru
      _
  $region6: #{cross_entropy_loss.1} parent=0 // loop_footer
    %s12 = sadd.s32 1, %s8
  $region7: #{cross_entropy_loss.1} parent=0 // loop_footer_branch
    %7 = sbr.rel target = $region3
  $region8: #{cross_entropy_loss.1} parent=0 // loop_exit
    _

</llo_original>
